<compile_context>
chip_gen: v6e
topology: v6e:2x2x1
jax: 0.10.0
libtpu: 0.0.40
codegen_flags: <defaults>
</compile_context>

<pallas_src>
import jax
import jax.numpy as jnp
from jax.experimental import pallas as pl
from jax.experimental.pallas import tpu as pltpu

INPUT_SIZE = 1000
HIDDEN1 = 128
HIDDEN2 = 64
NUM_CLASSES = 19

# lane-dense padded sizes (last dims of every matmul output)
H1_PAD = 128      # already lane-dense
H2_PAD = 128      # hidden2 64 -> 128 (zero-padded cols)
N_PAD = 128       # classes 19 -> 128 (zero-padded cols)

MAX_TB = 1024     # batch tile rows; f32 x tile double-buffers ~8 MiB at 1024


def mlp_kernel(x_ref, w1_ref, b1_ref, w2_ref, b2_ref, w3_ref, b3_ref, o_ref):
    # fc1 + ReLU: x arrives f32 straight from HBM; cast to bf16 only at the MXU
    x_bf = x_ref[...].astype(jnp.bfloat16)
    h1 = jnp.dot(x_bf, w1_ref[...], preferred_element_type=jnp.float32)
    h1 = jnp.maximum(h1 + b1_ref[...], 0.0)

    # dropout(p=0.5): identity at inference time (PyTorch eval() semantics)
    # TODO(synk): training-mode dropout (pltpu.prng_seed/prng_random_bits + 2x scale)

    # fc2 + ReLU (padded cols of w2/b2 are zero -> exact zeros through ReLU)
    h2 = jnp.dot(h1.astype(jnp.bfloat16), w2_ref[...],
                 preferred_element_type=jnp.float32)
    h2 = jnp.maximum(h2 + b2_ref[...], 0.0)

    # fc3 (logits, no activation); padded logit columns carry exact zeros
    out = jnp.dot(h2.astype(jnp.bfloat16), w3_ref[...],
                  preferred_element_type=jnp.float32)
    o_ref[...] = (out + b3_ref[...]).astype(o_ref.dtype)   # bf16 writeback


def _round_up(v, m):
    return ((v + m - 1) // m) * m


def _pad2d(a, rows, cols, dtype):
    out = jnp.zeros((rows, cols), dtype)
    return out.at[: a.shape[0], : a.shape[1]].set(a.astype(dtype))


def prepare_params(w1, b1, w2, b2, w3, b3):
    """Pad to lane-dense shapes; weights -> bf16, biases stay f32.
    Weights are (in_features, out_features) so the kernel computes x @ W + b.
    w1 keeps K=1000 (no pad needed: x is fed unpadded)."""
    w1p = _pad2d(w1, INPUT_SIZE, H1_PAD, jnp.bfloat16)
    w2p = _pad2d(w2, H1_PAD, H2_PAD, jnp.bfloat16)
    w3p = _pad2d(w3, H2_PAD, N_PAD, jnp.bfloat16)
    b1p = _pad2d(b1.reshape(1, -1), 1, H1_PAD, jnp.float32)
    b2p = _pad2d(b2.reshape(1, -1), 1, H2_PAD, jnp.float32)
    b3p = _pad2d(b3.reshape(1, -1), 1, N_PAD, jnp.float32)
    return w1p, b1p, w2p, b2p, w3p, b3p


def _forward(x, params):
    """x: (B, 1000) f32 -> logits (B, 19) f32."""
    w1p, b1p, w2p, b2p, w3p, b3p = params
    B = x.shape[0]

    # Target >=2 grid steps so v7x's two TensorCores both get work; align tile
    # rows to 16 (bf16 sublane packing) when big enough, else 8.  Ragged last
    # blocks are fine: OOB reads feed only discarded output rows, OOB writes
    # are dropped by Pallas.
    half = pl.cdiv(B, 2)
    align = 16 if half >= 16 else 8
    tb = min(MAX_TB, _round_up(max(half, align), align))
    grid = (pl.cdiv(B, tb),)

    flops = 2 * B * (INPUT_SIZE * H1_PAD + H1_PAD * H2_PAD + H2_PAD * N_PAD)
    bytes_accessed = (
        B * INPUT_SIZE * 4                                                # x (f32)
        + (INPUT_SIZE * H1_PAD + H1_PAD * H2_PAD + H2_PAD * N_PAD) * 2    # bf16 weights
        + (H1_PAD + H2_PAD + N_PAD) * 4                                   # f32 biases
        + B * N_PAD * 2)                                                  # bf16 logits

    resident = lambda shape: pl.BlockSpec(shape, lambda i: (0, 0))

    out_padded = pl.pallas_call(
        mlp_kernel,
        out_shape=jax.ShapeDtypeStruct((B, N_PAD), jnp.bfloat16),
        grid=grid,
        in_specs=[
            pl.BlockSpec((tb, INPUT_SIZE), lambda i: (i, 0)),  # x tile (moves per step)
            resident(w1p.shape), resident(b1p.shape),          # weights stay resident
            resident(w2p.shape), resident(b2p.shape),
            resident(w3p.shape), resident(b3p.shape),
        ],
        out_specs=pl.BlockSpec((tb, N_PAD), lambda i: (i, 0)),
        compiler_params=pltpu.CompilerParams(
            dimension_semantics=("parallel",),
            vmem_limit_bytes=32 * 1024 * 1024),
        cost_estimate=pl.CostEstimate(
            flops=flops, transcendentals=0, bytes_accessed=bytes_accessed),
    )(x, w1p, b1p, w2p, b2p, w3p, b3p)

    return out_padded[:, :NUM_CLASSES].astype(jnp.float32)


neural_net_forward = jax.jit(_forward)


def init_linear_params(key, fan_in, fan_out):
    """Deterministic init mimicking PyTorch Linear default:
    U(-1/sqrt(fan_in), 1/sqrt(fan_in)) for both weight and bias.
    Weight stored transposed relative to PyTorch: (in, out) so kernel does x @ W."""
    kw, kb = jax.random.split(key)
    bound = 1.0 / jnp.sqrt(jnp.float32(fan_in))
    w = jax.random.uniform(kw, (fan_in, fan_out), jnp.float32, -bound, bound)
    b = jax.random.uniform(kb, (1, fan_out), jnp.float32, -bound, bound)
    return w, b


if __name__ == "__main__":
    root = jax.random.PRNGKey(0)
    k_x, k1, k2, k3 = jax.random.split(root, 4)

    B = 8  # small batch
    x = jax.random.normal(k_x, (B, INPUT_SIZE), jnp.float32)

    w1, b1 = init_linear_params(k1, INPUT_SIZE, HIDDEN1)
    w2, b2 = init_linear_params(k2, HIDDEN1, HIDDEN2)
    w3, b3 = init_linear_params(k3, HIDDEN2, NUM_CLASSES)

    params = prepare_params(w1, b1, w2, b2, w3, b3)
    out = neural_net_forward(x, params)
    out = jax.block_until_ready(out)

    # pure-JAX reference using the same bf16 weights / activations
    x_bf = x.astype(jnp.bfloat16)
    w1_bf, w2_bf, w3_bf = (w1.astype(jnp.bfloat16), w2.astype(jnp.bfloat16),
                           w3.astype(jnp.bfloat16))
    h1 = jnp.maximum(
        jnp.dot(x_bf, w1_bf, preferred_element_type=jnp.float32) + b1, 0.0)
    h2 = jnp.maximum(
        jnp.dot(h1.astype(jnp.bfloat16), w2_bf,
                preferred_element_type=jnp.float32) + b2, 0.0)
    ref = jnp.dot(h2.astype(jnp.bfloat16), w3_bf,
                  preferred_element_type=jnp.float32) + b3

    assert out.shape == (B, NUM_CLASSES)
    assert jnp.allclose(out, ref, atol=2e-2, rtol=2e-2), (
        float(jnp.max(jnp.abs(out - ref))))

    print("KERNEL_OK")
</pallas_src>

<mosaic_0001>
module attributes {stable_mosaic.version = 11 : i64} {
  func.func @mlp_kernel(%arg0: i32, %arg1: memref<8x1000xf32, #tpu.memory_space<vmem>>, %arg2: memref<1000x128xbf16, #tpu.memory_space<vmem>>, %arg3: memref<1x128xf32, #tpu.memory_space<vmem>>, %arg4: memref<128x128xbf16, #tpu.memory_space<vmem>>, %arg5: memref<1x128xf32, #tpu.memory_space<vmem>>, %arg6: memref<128x128xbf16, #tpu.memory_space<vmem>>, %arg7: memref<1x128xf32, #tpu.memory_space<vmem>>, %arg8: memref<8x128xbf16, #tpu.memory_space<vmem>>) attributes {dimension_semantics = [#tpu.dimension_semantics<parallel>], iteration_bounds = array<i64: 1>, scalar_prefetch = 0 : i64, scratch_operands = 0 : i64, tpu.core_type = #tpu.core_type<tc>, window_params = [{transform_indices = @transform_0, window_bounds = array<i64: 8, 1000>}, {pipeline_mode = #tpu.pipeline_mode<synchronous>, transform_indices = @transform_1, window_bounds = array<i64: 1000, 128>}, {pipeline_mode = #tpu.pipeline_mode<synchronous>, transform_indices = @transform_2, window_bounds = array<i64: 1, 128>}, {pipeline_mode = #tpu.pipeline_mode<synchronous>, transform_indices = @transform_3, window_bounds = array<i64: 128, 128>}, {pipeline_mode = #tpu.pipeline_mode<synchronous>, transform_indices = @transform_4, window_bounds = array<i64: 1, 128>}, {pipeline_mode = #tpu.pipeline_mode<synchronous>, transform_indices = @transform_5, window_bounds = array<i64: 128, 128>}, {pipeline_mode = #tpu.pipeline_mode<synchronous>, transform_indices = @transform_6, window_bounds = array<i64: 1, 128>}, {transform_indices = @transform_7, window_bounds = array<i64: 8, 128>}]} {
    %c0 = arith.constant 0 : index
    %c0_0 = arith.constant 0 : index
    %0 = vector.load %arg1[%c0, %c0_0] : memref<8x1000xf32, #tpu.memory_space<vmem>>, vector<8x1000xf32>
    %1 = arith.truncf %0 : vector<8x1000xf32> to vector<8x1000xbf16>
    %c0_1 = arith.constant 0 : index
    %c0_2 = arith.constant 0 : index
    %2 = vector.load %arg2[%c0_1, %c0_2] : memref<1000x128xbf16, #tpu.memory_space<vmem>>, vector<1000x128xbf16>
    %cst = arith.constant dense<0.000000e+00> : vector<8x128xf32>
    %3 = tpu.matmul %1, %2, %cst {dimension_numbers = #tpu.dot_dimension_numbers<[1], [0], [0], [1], [0, 0, 1, 1], [], []>} : vector<8x1000xbf16>, vector<1000x128xbf16>, vector<8x128xf32> -> vector<8x128xf32>
    %c0_3 = arith.constant 0 : index
    %c0_4 = arith.constant 0 : index
    %4 = vector.load %arg3[%c0_3, %c0_4] : memref<1x128xf32, #tpu.memory_space<vmem>>, vector<1x128xf32>
    %5 = vector.broadcast %4 : vector<1x128xf32> to vector<8x128xf32>
    %6 = arith.addf %3, %5 : vector<8x128xf32>
    %cst_5 = arith.constant 0.000000e+00 : f32
    %7 = vector.broadcast %cst_5 : f32 to vector<8x128xf32>
    %8 = arith.maximumf %6, %7 : vector<8x128xf32>
    %9 = arith.truncf %8 : vector<8x128xf32> to vector<8x128xbf16>
    %c0_6 = arith.constant 0 : index
    %c0_7 = arith.constant 0 : index
    %10 = vector.load %arg4[%c0_6, %c0_7] : memref<128x128xbf16, #tpu.memory_space<vmem>>, vector<128x128xbf16>
    %cst_8 = arith.constant dense<0.000000e+00> : vector<8x128xf32>
    %11 = tpu.matmul %9, %10, %cst_8 {dimension_numbers = #tpu.dot_dimension_numbers<[1], [0], [0], [1], [0, 0, 1, 1], [], []>} : vector<8x128xbf16>, vector<128x128xbf16>, vector<8x128xf32> -> vector<8x128xf32>
    %c0_9 = arith.constant 0 : index
    %c0_10 = arith.constant 0 : index
    %12 = vector.load %arg5[%c0_9, %c0_10] : memref<1x128xf32, #tpu.memory_space<vmem>>, vector<1x128xf32>
    %13 = vector.broadcast %12 : vector<1x128xf32> to vector<8x128xf32>
    %14 = arith.addf %11, %13 : vector<8x128xf32>
    %cst_11 = arith.constant 0.000000e+00 : f32
    %15 = vector.broadcast %cst_11 : f32 to vector<8x128xf32>
    %16 = arith.maximumf %14, %15 : vector<8x128xf32>
    %17 = arith.truncf %16 : vector<8x128xf32> to vector<8x128xbf16>
    %c0_12 = arith.constant 0 : index
    %c0_13 = arith.constant 0 : index
    %18 = vector.load %arg6[%c0_12, %c0_13] : memref<128x128xbf16, #tpu.memory_space<vmem>>, vector<128x128xbf16>
    %cst_14 = arith.constant dense<0.000000e+00> : vector<8x128xf32>
    %19 = tpu.matmul %17, %18, %cst_14 {dimension_numbers = #tpu.dot_dimension_numbers<[1], [0], [0], [1], [0, 0, 1, 1], [], []>} : vector<8x128xbf16>, vector<128x128xbf16>, vector<8x128xf32> -> vector<8x128xf32>
    %c0_15 = arith.constant 0 : index
    %c0_16 = arith.constant 0 : index
    %20 = vector.load %arg7[%c0_15, %c0_16] : memref<1x128xf32, #tpu.memory_space<vmem>>, vector<1x128xf32>
    %21 = vector.broadcast %20 : vector<1x128xf32> to vector<8x128xf32>
    %22 = arith.addf %19, %21 : vector<8x128xf32>
    %23 = arith.truncf %22 : vector<8x128xf32> to vector<8x128xbf16>
    %c0_17 = arith.constant 0 : index
    %c0_18 = arith.constant 0 : index
    %24 = vector.load %arg8[%c0_17, %c0_18] : memref<8x128xbf16, #tpu.memory_space<vmem>>, vector<8x128xbf16>
    tpu.vector_store %arg8[%c0_17, %c0_18], %23 {strides = array<i32>} : memref<8x128xbf16, #tpu.memory_space<vmem>>, vector<8x128xbf16>,
    return
  }
  func.func @transform_0(%arg0: i32) -> (i32, i32) {
    %c0_i32 = arith.constant 0 : i32
    %c0_i32_0 = arith.constant 0 : i32
    return %arg0, %c0_i32 : i32, i32
  }
  func.func @transform_1(%arg0: i32) -> (i32, i32) {
    %c0_i32 = arith.constant 0 : i32
    %c0_i32_0 = arith.constant 0 : i32
    %c0_i32_1 = arith.constant 0 : i32
    return %c0_i32, %c0_i32_0 : i32, i32
  }
  func.func @transform_2(%arg0: i32) -> (i32, i32) {
    %c0_i32 = arith.constant 0 : i32
    %c0_i32_0 = arith.constant 0 : i32
    %c0_i32_1 = arith.constant 0 : i32
    return %c0_i32, %c0_i32_0 : i32, i32
  }
  func.func @transform_3(%arg0: i32) -> (i32, i32) {
    %c0_i32 = arith.constant 0 : i32
    %c0_i32_0 = arith.constant 0 : i32
    %c0_i32_1 = arith.constant 0 : i32
    return %c0_i32, %c0_i32_0 : i32, i32
  }
  func.func @transform_4(%arg0: i32) -> (i32, i32) {
    %c0_i32 = arith.constant 0 : i32
    %c0_i32_0 = arith.constant 0 : i32
    %c0_i32_1 = arith.constant 0 : i32
    return %c0_i32, %c0_i32_0 : i32, i32
  }
  func.func @transform_5(%arg0: i32) -> (i32, i32) {
    %c0_i32 = arith.constant 0 : i32
    %c0_i32_0 = arith.constant 0 : i32
    %c0_i32_1 = arith.constant 0 : i32
    return %c0_i32, %c0_i32_0 : i32, i32
  }
  func.func @transform_6(%arg0: i32) -> (i32, i32) {
    %c0_i32 = arith.constant 0 : i32
    %c0_i32_0 = arith.constant 0 : i32
    %c0_i32_1 = arith.constant 0 : i32
    return %c0_i32, %c0_i32_0 : i32, i32
  }
  func.func @transform_7(%arg0: i32) -> (i32, i32) {
    %c0_i32 = arith.constant 0 : i32
    %c0_i32_0 = arith.constant 0 : i32
    return %arg0, %c0_i32 : i32, i32
  }
}

</mosaic_0001>

<llo_original>
// kernel: _forward.1
$region0: #{_forward.1}
  #allocation0 [shape = 'u32[]', space=smem, size = 0x4, offset = 0x4, fixed_abs, tag = 'smem constant byte address 0x4 - core index']
  #allocation1 [shape = 'u32[144,128]{1,0:T(1,128)}', space=vmem, size = 0x12000, scoped, tag = 'internal scratch']
  %s0 = inlined_call_operand.hbm [shape: f32[8,1000], index: 0, kind: input, shape index: {}]
  %s1 = inlined_call_operand.hbm [shape: bf16[1000,128], index: 1, kind: input, shape index: {}]
  %s2 = inlined_call_operand.vmem [shape: f32[1,128], index: 2, kind: input, shape index: {}]
  %s3 = inlined_call_operand.hbm [shape: bf16[128,128], index: 3, kind: input, shape index: {}]
  %s4 = inlined_call_operand.vmem [shape: f32[1,128], index: 4, kind: input, shape index: {}]
  %s5 = inlined_call_operand.hbm [shape: bf16[128,128], index: 5, kind: input, shape index: {}]
  %s6 = inlined_call_operand.vmem [shape: f32[1,128], index: 6, kind: input, shape index: {}]
  %s7 = inlined_call_operand.vmem [shape: bf16[8,128], index: 7, kind: output, shape index: {}]
  %s8 = sld [smem:[#allocation0]]
  $region54: #{_forward.1} parent=0
    _
  %s10 = ssub.s32 1, %s8
  %s11 = scalar_select 0, %s10, %s8
  $region1: #{_forward.1} parent=0
    #allocation2 [shape = 'u8[32768]{0}', space=vmem, size = 0x8000, scoped, tag = 'input window, operand 0, single buffered']
    #allocation3 [shape = 's32[1]{0}', space=sflag, size = 0x4, scoped, tag = 'scoped memory for _forward.1']
    #allocation4 [shape = 'u8[256000]{0}', space=vmem, size = 0x3e800, scoped, tag = 'input window, operand 1, single buffered']
    #allocation5 [shape = 's32[1]{0}', space=sflag, size = 0x4, scoped, tag = 'scoped memory for _forward.1']
    #allocation6 [shape = 'u8[32768]{0}', space=vmem, size = 0x8000, scoped, tag = 'input window, operand 3, single buffered']
    #allocation7 [shape = 'u8[32768]{0}', space=vmem, size = 0x8000, scoped, tag = 'input window, operand 5, single buffered']
    #allocation8 [shape = 's32[1]{0}', space=sflag, size = 0x4, scoped, tag = 'scoped memory for _forward.1']
    %12 = vsyncpa [#allocation3], 0
    %13 = vsyncpa [#allocation5], 0
    %14 = vsyncpa [#allocation8], 0
    // Predicated region
    $region2: #{_forward.1} parent=1 // pred_check
      _
    $region3: #{_forward.1} parent=1 // pred_check_branch
      %16 = sbr.rel (0) target = $region5
    $region4: #{_forward.1} parent=1 // pred_region
      %s18 = ssub.s32 1024, 1024
      %19 = vsyncadd [#allocation3], %s18
      %s21 = sshll.u32 [#allocation2], 4
      %s22 = int_to_ptr.vmem [resolvable:$true] %s21
      %24 = dma.hbm_to_vmem [thread:$0]  %s0, 1024, %s22, [#allocation3]
    $region5: #{_forward.1} parent=1 // pred_fallthru
      _
    // Predicated region
    $region6: #{_forward.1} parent=1 // pred_check
      _
    $region7: #{_forward.1} parent=1 // pred_check_branch
      %26 = sbr.rel (0) target = $region9
    $region8: #{_forward.1} parent=1 // pred_region
      %s28 = ssub.s32 8000, 8000
      %29 = vsyncadd [#allocation5], %s28
      %s30 = sshll.u32 [#allocation4], 4
      %s31 = int_to_ptr.vmem [resolvable:$true] %s30
      %36 = dma.hbm_to_vmem [thread:$0]  %s1, 8000, %s31, [#allocation5], 64, 64, 4
    $region9: #{_forward.1} parent=1 // pred_fallthru
      _
    // Predicated region
    $region10: #{_forward.1} parent=1 // pred_check
      _
    $region11: #{_forward.1} parent=1 // pred_check_branch
      %38 = sbr.rel (0) target = $region13
    $region12: #{_forward.1} parent=1 // pred_region
      _
    $region13: #{_forward.1} parent=1 // pred_fallthru
      _
    // Predicated region
    $region14: #{_forward.1} parent=1 // pred_check
      _
    $region15: #{_forward.1} parent=1 // pred_check_branch
      %40 = sbr.rel (0) target = $region17
    $region16: #{_forward.1} parent=1 // pred_region
      %s42 = ssub.s32 1024, 1024
      %43 = vsyncadd [#allocation5], %s42
      %s44 = sshll.u32 [#allocation6], 4
      %s45 = int_to_ptr.vmem [resolvable:$true] %s44
      %50 = dma.hbm_to_vmem [thread:$0]  %s3, 1024, %s45, [#allocation5], 64, 64, 4
    $region17: #{_forward.1} parent=1 // pred_fallthru
      _
    // Predicated region
    $region18: #{_forward.1} parent=1 // pred_check
      _
    $region19: #{_forward.1} parent=1 // pred_check_branch
      %52 = sbr.rel (0) target = $region21
    $region20: #{_forward.1} parent=1 // pred_region
      _
    $region21: #{_forward.1} parent=1 // pred_fallthru
      _
    // Predicated region
    $region22: #{_forward.1} parent=1 // pred_check
      _
    $region23: #{_forward.1} parent=1 // pred_check_branch
      %54 = sbr.rel (0) target = $region25
    $region24: #{_forward.1} parent=1 // pred_region
      %s56 = ssub.s32 1024, 1024
      %57 = vsyncadd [#allocation8], %s56
      %s58 = sshll.u32 [#allocation7], 4
      %s59 = int_to_ptr.vmem [resolvable:$true] %s58
      %64 = dma.hbm_to_vmem [thread:$0]  %s5, 1024, %s59, [#allocation8], 64, 64, 4
    $region25: #{_forward.1} parent=1 // pred_fallthru
      _
    // Predicated region
    $region26: #{_forward.1} parent=1 // pred_check
      _
    $region27: #{_forward.1} parent=1 // pred_check_branch
      %66 = sbr.rel (0) target = $region29
    $region28: #{_forward.1} parent=1 // pred_region
      _
    $region29: #{_forward.1} parent=1 // pred_fallthru
      _
    // Predicated region
    $region30: #{_forward.1} parent=1 // pred_check
      _
    $region31: #{_forward.1} parent=1 // pred_check_branch
      %68 = sbr.rel (0) target = $region33
    $region32: #{_forward.1} parent=1 // pred_region
      %69 = dma.done [#allocation3], 1024
    $region33: #{_forward.1} parent=1 // pred_fallthru
      _
    // Predicated region
    $region34: #{_forward.1} parent=1 // pred_check
      _
    $region35: #{_forward.1} parent=1 // pred_check_branch
      %71 = sbr.rel (0) target = $region37
    $region36: #{_forward.1} parent=1 // pred_region
      %72 = dma.done [#allocation5], 8000
    $region37: #{_forward.1} parent=1 // pred_fallthru
      _
    // Predicated region
    $region38: #{_forward.1} parent=1 // pred_check
      _
    $region39: #{_forward.1} parent=1 // pred_check_branch
      %74 = sbr.rel (0) target = $region41
    $region40: #{_forward.1} parent=1 // pred_region
      %75 = dma.done [#allocation5], 1024
    $region41: #{_forward.1} parent=1 // pred_fallthru
      _
    // Predicated region
    $region42: #{_forward.1} parent=1 // pred_check
      _
    $region43: #{_forward.1} parent=1 // pred_check_branch
      %77 = sbr.rel (0) target = $region45
    $region44: #{_forward.1} parent=1 // pred_region
      %78 = dma.done [#allocation8], 1024
    $region45: #{_forward.1} parent=1 // pred_fallthru
      _
    %v80 = vld [vmem:[#allocation2] sm:$0xff]
    %v81 = vld [vmem:[#allocation2 + $0x8] sm:$0xff]
    %v82 = vld [vmem:[#allocation2 + $0x10] sm:$0xff]
    %v83 = vld [vmem:[#allocation2 + $0x18] sm:$0xff]
    %v84 = vld [vmem:[#allocation2 + $0x20] sm:$0xff]
    %v85 = vld [vmem:[#allocation2 + $0x28] sm:$0xff]
    %v86 = vld [vmem:[#allocation2 + $0x30] sm:$0xff]
    %v87 = vld [vmem:[#allocation2 + $0x38] sm:$0xff]
    %v88 = vpack.c.bf16 %v80, %v80
    %v89 = vpack.c.bf16 %v81, %v81
    %v90 = vpack.c.bf16 %v82, %v82
    %v91 = vpack.c.bf16 %v83, %v83
    %v92 = vpack.c.bf16 %v84, %v84
    %v93 = vpack.c.bf16 %v85, %v85
    %v94 = vpack.c.bf16 %v86, %v86
    %v95 = vpack.c.bf16 %v87, %v87
    %v96 = vld [vmem:[#allocation4] sm:$0xf]
    %v97 = vld [vmem:[#allocation4 + $0x4] sm:$0xf]
    %v98 = vld [vmem:[#allocation4 + $0x8] sm:$0xf]
    %v99 = vld [vmem:[#allocation4 + $0xc] sm:$0xf]
    %v100 = vld [vmem:[#allocation4 + $0x10] sm:$0xf]
    %v101 = vld [vmem:[#allocation4 + $0x14] sm:$0xf]
    %v102 = vld [vmem:[#allocation4 + $0x18] sm:$0xf]
    %v103 = vld [vmem:[#allocation4 + $0x1c] sm:$0xf]
    %v104 = vld [vmem:[#allocation4 + $0x20] sm:$0xf]
    %v105 = vld [vmem:[#allocation4 + $0x24] sm:$0xf]
    %v106 = vld [vmem:[#allocation4 + $0x28] sm:$0xf]
    %v107 = vld [vmem:[#allocation4 + $0x2c] sm:$0xf]
    %v108 = vld [vmem:[#allocation4 + $0x30] sm:$0xf]
    %v109 = vld [vmem:[#allocation4 + $0x34] sm:$0xf]
    %v110 = vld [vmem:[#allocation4 + $0x38] sm:$0xf]
    %v111 = vld [vmem:[#allocation4 + $0x3c] sm:$0xf]
    %v112 = vld [vmem:[#allocation4 + $0x40] sm:$0xf]
    %v113 = vld [vmem:[#allocation4 + $0x44] sm:$0xf]
    %v114 = vld [vmem:[#allocation4 + $0x48] sm:$0xf]
    %v115 = vld [vmem:[#allocation4 + $0x4c] sm:$0xf]
    %v116 = vld [vmem:[#allocation4 + $0x50] sm:$0xf]
    %v117 = vld [vmem:[#allocation4 + $0x54] sm:$0xf]
    %v118 = vld [vmem:[#allocation4 + $0x58] sm:$0xf]
    %v119 = vld [vmem:[#allocation4 + $0x5c] sm:$0xf]
    %v120 = vld [vmem:[#allocation4 + $0x60] sm:$0xf]
    %v121 = vld [vmem:[#allocation4 + $0x64] sm:$0xf]
    %v122 = vld [vmem:[#allocation4 + $0x68] sm:$0xf]
    %v123 = vld [vmem:[#allocation4 + $0x6c] sm:$0xf]
    %v124 = vld [vmem:[#allocation4 + $0x70] sm:$0xf]
    %v125 = vld [vmem:[#allocation4 + $0x74] sm:$0xf]
    %v126 = vld [vmem:[#allocation4 + $0x78] sm:$0xf]
    %v127 = vld [vmem:[#allocation4 + $0x7c] sm:$0xf]
    %v128 = vld [vmem:[#allocation4 + $0x80] sm:$0xf]
    %v129 = vld [vmem:[#allocation4 + $0x84] sm:$0xf]
    %v130 = vld [vmem:[#allocation4 + $0x88] sm:$0xf]
    %v131 = vld [vmem:[#allocation4 + $0x8c] sm:$0xf]
    %v132 = vld [vmem:[#allocation4 + $0x90] sm:$0xf]
    %v133 = vld [vmem:[#allocation4 + $0x94] sm:$0xf]
    %v134 = vld [vmem:[#allocation4 + $0x98] sm:$0xf]
    %v135 = vld [vmem:[#allocation4 + $0x9c] sm:$0xf]
    %v136 = vld [vmem:[#allocation4 + $0xa0] sm:$0xf]
    %v137 = vld [vmem:[#allocation4 + $0xa4] sm:$0xf]
    %v138 = vld [vmem:[#allocation4 + $0xa8] sm:$0xf]
    %v139 = vld [vmem:[#allocation4 + $0xac] sm:$0xf]
    %v140 = vld [vmem:[#allocation4 + $0xb0] sm:$0xf]
    %v141 = vld [vmem:[#allocation4 + $0xb4] sm:$0xf]
    %v142 = vld [vmem:[#allocation4 + $0xb8] sm:$0xf]
    %v143 = vld [vmem:[#allocation4 + $0xbc] sm:$0xf]
    %v144 = vld [vmem:[#allocation4 + $0xc0] sm:$0xf]
    %v145 = vld [vmem:[#allocation4 + $0xc4] sm:$0xf]
    %v146 = vld [vmem:[#allocation4 + $0xc8] sm:$0xf]
    %v147 = vld [vmem:[#allocation4 + $0xcc] sm:$0xf]
    %v148 = vld [vmem:[#allocation4 + $0xd0] sm:$0xf]
    %v149 = vld [vmem:[#allocation4 + $0xd4] sm:$0xf]
    %v150 = vld [vmem:[#allocation4 + $0xd8] sm:$0xf]
    %v151 = vld [vmem:[#allocation4 + $0xdc] sm:$0xf]
    %v152 = vld [vmem:[#allocation4 + $0xe0] sm:$0xf]
    %v153 = vld [vmem:[#allocation4 + $0xe4] sm:$0xf]
    %v154 = vld [vmem:[#allocation4 + $0xe8] sm:$0xf]
    %v155 = vld [vmem:[#allocation4 + $0xec] sm:$0xf]
    %v156 = vld [vmem:[#allocation4 + $0xf0] sm:$0xf]
    %v157 = vld [vmem:[#allocation4 + $0xf4] sm:$0xf]
    %v158 = vld [vmem:[#allocation4 + $0xf8] sm:$0xf]
    %v159 = vld [vmem:[#allocation4 + $0xfc] sm:$0xf]
    %v160 = vld [vmem:[#allocation4 + $0x100] sm:$0xf]
    %v161 = vld [vmem:[#allocation4 + $0x104] sm:$0xf]
    %v162 = vld [vmem:[#allocation4 + $0x108] sm:$0xf]
    %v163 = vld [vmem:[#allocation4 + $0x10c] sm:$0xf]
    %v164 = vld [vmem:[#allocation4 + $0x110] sm:$0xf]
    %v165 = vld [vmem:[#allocation4 + $0x114] sm:$0xf]
    %v166 = vld [vmem:[#allocation4 + $0x118] sm:$0xf]
    %v167 = vld [vmem:[#allocation4 + $0x11c] sm:$0xf]
    %v168 = vld [vmem:[#allocation4 + $0x120] sm:$0xf]
    %v169 = vld [vmem:[#allocation4 + $0x124] sm:$0xf]
    %v170 = vld [vmem:[#allocation4 + $0x128] sm:$0xf]
    %v171 = vld [vmem:[#allocation4 + $0x12c] sm:$0xf]
    %v172 = vld [vmem:[#allocation4 + $0x130] sm:$0xf]
    %v173 = vld [vmem:[#allocation4 + $0x134] sm:$0xf]
    %v174 = vld [vmem:[#allocation4 + $0x138] sm:$0xf]
    %v175 = vld [vmem:[#allocation4 + $0x13c] sm:$0xf]
    %v176 = vld [vmem:[#allocation4 + $0x140] sm:$0xf]
    %v177 = vld [vmem:[#allocation4 + $0x144] sm:$0xf]
    %v178 = vld [vmem:[#allocation4 + $0x148] sm:$0xf]
    %v179 = vld [vmem:[#allocation4 + $0x14c] sm:$0xf]
    %v180 = vld [vmem:[#allocation4 + $0x150] sm:$0xf]
    %v181 = vld [vmem:[#allocation4 + $0x154] sm:$0xf]
    %v182 = vld [vmem:[#allocation4 + $0x158] sm:$0xf]
    %v183 = vld [vmem:[#allocation4 + $0x15c] sm:$0xf]
    %v184 = vld [vmem:[#allocation4 + $0x160] sm:$0xf]
    %v185 = vld [vmem:[#allocation4 + $0x164] sm:$0xf]
    %v186 = vld [vmem:[#allocation4 + $0x168] sm:$0xf]
    %v187 = vld [vmem:[#allocation4 + $0x16c] sm:$0xf]
    %v188 = vld [vmem:[#allocation4 + $0x170] sm:$0xf]
    %v189 = vld [vmem:[#allocation4 + $0x174] sm:$0xf]
    %v190 = vld [vmem:[#allocation4 + $0x178] sm:$0xf]
    %v191 = vld [vmem:[#allocation4 + $0x17c] sm:$0xf]
    %v192 = vld [vmem:[#allocation4 + $0x180] sm:$0xf]
    %v193 = vld [vmem:[#allocation4 + $0x184] sm:$0xf]
    %v194 = vld [vmem:[#allocation4 + $0x188] sm:$0xf]
    %v195 = vld [vmem:[#allocation4 + $0x18c] sm:$0xf]
    %v196 = vld [vmem:[#allocation4 + $0x190] sm:$0xf]
    %v197 = vld [vmem:[#allocation4 + $0x194] sm:$0xf]
    %v198 = vld [vmem:[#allocation4 + $0x198] sm:$0xf]
    %v199 = vld [vmem:[#allocation4 + $0x19c] sm:$0xf]
    %v200 = vld [vmem:[#allocation4 + $0x1a0] sm:$0xf]
    %v201 = vld [vmem:[#allocation4 + $0x1a4] sm:$0xf]
    %v202 = vld [vmem:[#allocation4 + $0x1a8] sm:$0xf]
    %v203 = vld [vmem:[#allocation4 + $0x1ac] sm:$0xf]
    %v204 = vld [vmem:[#allocation4 + $0x1b0] sm:$0xf]
    %v205 = vld [vmem:[#allocation4 + $0x1b4] sm:$0xf]
    %v206 = vld [vmem:[#allocation4 + $0x1b8] sm:$0xf]
    %v207 = vld [vmem:[#allocation4 + $0x1bc] sm:$0xf]
    %v208 = vld [vmem:[#allocation4 + $0x1c0] sm:$0xf]
    %v209 = vld [vmem:[#allocation4 + $0x1c4] sm:$0xf]
    %v210 = vld [vmem:[#allocation4 + $0x1c8] sm:$0xf]
    %v211 = vld [vmem:[#allocation4 + $0x1cc] sm:$0xf]
    %v212 = vld [vmem:[#allocation4 + $0x1d0] sm:$0xf]
    %v213 = vld [vmem:[#allocation4 + $0x1d4] sm:$0xf]
    %v214 = vld [vmem:[#allocation4 + $0x1d8] sm:$0xf]
    %v215 = vld [vmem:[#allocation4 + $0x1dc] sm:$0xf]
    %v216 = vld [vmem:[#allocation4 + $0x1e0] sm:$0xf]
    %v217 = vld [vmem:[#allocation4 + $0x1e4] sm:$0xf]
    %v218 = vld [vmem:[#allocation4 + $0x1e8] sm:$0xf]
    %v219 = vld [vmem:[#allocation4 + $0x1ec] sm:$0xf]
    %v220 = vld [vmem:[#allocation4 + $0x1f0] sm:$0xf]
    %v221 = vld [vmem:[%s2] sm:$0x1]
    %v223 = vlaneseq
    %v224 = vshrl.u32 %v223, 7
    %v225 = vsub.s32 0, %v224
    %v226 = vrot.slane %v221, %v225
    %v353 = vunpack.c.l.b16 %v96
    %v354 = vunpack.c.l.b16 %v97
    %v355 = vunpack.c.l.b16 %v98
    %v356 = vunpack.c.l.b16 %v99
    %v357 = vunpack.c.l.b16 %v100
    %v358 = vunpack.c.l.b16 %v101
    %v359 = vunpack.c.l.b16 %v102
    %v360 = vunpack.c.l.b16 %v103
    %v361 = vunpack.c.l.b16 %v104
    %v362 = vunpack.c.l.b16 %v105
    %v363 = vunpack.c.l.b16 %v106
    %v364 = vunpack.c.l.b16 %v107
    %v365 = vunpack.c.l.b16 %v108
    %v366 = vunpack.c.l.b16 %v109
    %v367 = vunpack.c.l.b16 %v110
    %v368 = vunpack.c.l.b16 %v111
    %v369 = vunpack.c.l.b16 %v112
    %v370 = vunpack.c.l.b16 %v113
    %v371 = vunpack.c.l.b16 %v114
    %v372 = vunpack.c.l.b16 %v115
    %v373 = vunpack.c.l.b16 %v116
    %v374 = vunpack.c.l.b16 %v117
    %v375 = vunpack.c.l.b16 %v118
    %v376 = vunpack.c.l.b16 %v119
    %v377 = vunpack.c.l.b16 %v120
    %v378 = vunpack.c.l.b16 %v121
    %v379 = vunpack.c.l.b16 %v122
    %v380 = vunpack.c.l.b16 %v123
    %v381 = vunpack.c.l.b16 %v124
    %v382 = vunpack.c.l.b16 %v125
    %v383 = vunpack.c.l.b16 %v126
    %v384 = vunpack.c.l.b16 %v127
    %v385 = vunpack.c.l.b16 %v128
    %v386 = vunpack.c.l.b16 %v129
    %v387 = vunpack.c.l.b16 %v130
    %v388 = vunpack.c.l.b16 %v131
    %v389 = vunpack.c.l.b16 %v132
    %v390 = vunpack.c.l.b16 %v133
    %v391 = vunpack.c.l.b16 %v134
    %v392 = vunpack.c.l.b16 %v135
    %v393 = vunpack.c.l.b16 %v136
    %v394 = vunpack.c.l.b16 %v137
    %v395 = vunpack.c.l.b16 %v138
    %v396 = vunpack.c.l.b16 %v139
    %v397 = vunpack.c.l.b16 %v140
    %v398 = vunpack.c.l.b16 %v141
    %v399 = vunpack.c.l.b16 %v142
    %v400 = vunpack.c.l.b16 %v143
    %v401 = vunpack.c.l.b16 %v144
    %v402 = vunpack.c.l.b16 %v145
    %v403 = vunpack.c.l.b16 %v146
    %v404 = vunpack.c.l.b16 %v147
    %v405 = vunpack.c.l.b16 %v148
    %v406 = vunpack.c.l.b16 %v149
    %v407 = vunpack.c.l.b16 %v150
    %v408 = vunpack.c.l.b16 %v151
    %v409 = vunpack.c.l.b16 %v152
    %v410 = vunpack.c.l.b16 %v153
    %v411 = vunpack.c.l.b16 %v154
    %v412 = vunpack.c.l.b16 %v155
    %v413 = vunpack.c.l.b16 %v156
    %v414 = vunpack.c.l.b16 %v157
    %v415 = vunpack.c.l.b16 %v158
    %v416 = vunpack.c.l.b16 %v159
    %v417 = vunpack.c.l.b16 %v160
    %v418 = vunpack.c.l.b16 %v161
    %v419 = vunpack.c.l.b16 %v162
    %v420 = vunpack.c.l.b16 %v163
    %v421 = vunpack.c.l.b16 %v164
    %v422 = vunpack.c.l.b16 %v165
    %v423 = vunpack.c.l.b16 %v166
    %v424 = vunpack.c.l.b16 %v167
    %v425 = vunpack.c.l.b16 %v168
    %v426 = vunpack.c.l.b16 %v169
    %v427 = vunpack.c.l.b16 %v170
    %v428 = vunpack.c.l.b16 %v171
    %v429 = vunpack.c.l.b16 %v172
    %v430 = vunpack.c.l.b16 %v173
    %v431 = vunpack.c.l.b16 %v174
    %v432 = vunpack.c.l.b16 %v175
    %v433 = vunpack.c.l.b16 %v176
    %v434 = vunpack.c.l.b16 %v177
    %v435 = vunpack.c.l.b16 %v178
    %v436 = vunpack.c.l.b16 %v179
    %v437 = vunpack.c.l.b16 %v180
    %v438 = vunpack.c.l.b16 %v181
    %v439 = vunpack.c.l.b16 %v182
    %v440 = vunpack.c.l.b16 %v183
    %v441 = vunpack.c.l.b16 %v184
    %v442 = vunpack.c.l.b16 %v185
    %v443 = vunpack.c.l.b16 %v186
    %v444 = vunpack.c.l.b16 %v187
    %v445 = vunpack.c.l.b16 %v188
    %v446 = vunpack.c.l.b16 %v189
    %v447 = vunpack.c.l.b16 %v190
    %v448 = vunpack.c.l.b16 %v191
    %v449 = vunpack.c.l.b16 %v192
    %v450 = vunpack.c.l.b16 %v193
    %v451 = vunpack.c.l.b16 %v194
    %v452 = vunpack.c.l.b16 %v195
    %v453 = vunpack.c.l.b16 %v196
    %v454 = vunpack.c.l.b16 %v197
    %v455 = vunpack.c.l.b16 %v198
    %v456 = vunpack.c.l.b16 %v199
    %v457 = vunpack.c.l.b16 %v200
    %v458 = vunpack.c.l.b16 %v201
    %v459 = vunpack.c.l.b16 %v202
    %v460 = vunpack.c.l.b16 %v203
    %v461 = vunpack.c.l.b16 %v204
    %v462 = vunpack.c.l.b16 %v205
    %v463 = vunpack.c.l.b16 %v206
    %v464 = vunpack.c.l.b16 %v207
    %v465 = vunpack.c.l.b16 %v208
    %v466 = vunpack.c.l.b16 %v209
    %v467 = vunpack.c.l.b16 %v210
    %v468 = vunpack.c.l.b16 %v211
    %v469 = vunpack.c.l.b16 %v212
    %v470 = vunpack.c.l.b16 %v213
    %v471 = vunpack.c.l.b16 %v214
    %v472 = vunpack.c.l.b16 %v215
    %v473 = vunpack.c.l.b16 %v216
    %v474 = vunpack.c.l.b16 %v217
    %v475 = vunpack.c.l.b16 %v218
    %v476 = vunpack.c.l.b16 %v219
    %v477 = vunpack.c.l.b16 %v220
    %v478 = vpack.c.b16 %v354, %v353
    %v479 = vpack.c.b16 %v356, %v355
    %v480 = vpack.c.b16 %v358, %v357
    %v481 = vpack.c.b16 %v360, %v359
    %v482 = vpack.c.b16 %v362, %v361
    %v483 = vpack.c.b16 %v364, %v363
    %v484 = vpack.c.b16 %v366, %v365
    %v485 = vpack.c.b16 %v368, %v367
    %v486 = vpack.c.b16 %v370, %v369
    %v487 = vpack.c.b16 %v372, %v371
    %v488 = vpack.c.b16 %v374, %v373
    %v489 = vpack.c.b16 %v376, %v375
    %v490 = vpack.c.b16 %v378, %v377
    %v491 = vpack.c.b16 %v380, %v379
    %v492 = vpack.c.b16 %v382, %v381
    %v493 = vpack.c.b16 %v384, %v383
    %v494 = vpack.c.b16 %v386, %v385
    %v495 = vpack.c.b16 %v388, %v387
    %v496 = vpack.c.b16 %v390, %v389
    %v497 = vpack.c.b16 %v392, %v391
    %v498 = vpack.c.b16 %v394, %v393
    %v499 = vpack.c.b16 %v396, %v395
    %v500 = vpack.c.b16 %v398, %v397
    %v501 = vpack.c.b16 %v400, %v399
    %v502 = vpack.c.b16 %v402, %v401
    %v503 = vpack.c.b16 %v404, %v403
    %v504 = vpack.c.b16 %v406, %v405
    %v505 = vpack.c.b16 %v408, %v407
    %v506 = vpack.c.b16 %v410, %v409
    %v507 = vpack.c.b16 %v412, %v411
    %v508 = vpack.c.b16 %v414, %v413
    %v509 = vpack.c.b16 %v416, %v415
    %v510 = vpack.c.b16 %v418, %v417
    %v511 = vpack.c.b16 %v420, %v419
    %v512 = vpack.c.b16 %v422, %v421
    %v513 = vpack.c.b16 %v424, %v423
    %v514 = vpack.c.b16 %v426, %v425
    %v515 = vpack.c.b16 %v428, %v427
    %v516 = vpack.c.b16 %v430, %v429
    %v517 = vpack.c.b16 %v432, %v431
    %v518 = vpack.c.b16 %v434, %v433
    %v519 = vpack.c.b16 %v436, %v435
    %v520 = vpack.c.b16 %v438, %v437
    %v521 = vpack.c.b16 %v440, %v439
    %v522 = vpack.c.b16 %v442, %v441
    %v523 = vpack.c.b16 %v444, %v443
    %v524 = vpack.c.b16 %v446, %v445
    %v525 = vpack.c.b16 %v448, %v447
    %v526 = vpack.c.b16 %v450, %v449
    %v527 = vpack.c.b16 %v452, %v451
    %v528 = vpack.c.b16 %v454, %v453
    %v529 = vpack.c.b16 %v456, %v455
    %v530 = vpack.c.b16 %v458, %v457
    %v531 = vpack.c.b16 %v460, %v459
    %v532 = vpack.c.b16 %v462, %v461
    %v533 = vpack.c.b16 %v464, %v463
    %v534 = vpack.c.b16 %v466, %v465
    %v535 = vpack.c.b16 %v468, %v467
    %v536 = vpack.c.b16 %v470, %v469
    %v537 = vpack.c.b16 %v472, %v471
    %v538 = vpack.c.b16 %v474, %v473
    %v539 = vpack.c.b16 %v476, %v475
    %v540 = vpack.c.b16 %v477, %v477
    %vm603 = vcmask 850944
    %v605 = vsel %vm603, %v95, 0
    %vm607 = vcmask 1043456
    %v609 = vsel %vm607, %v540, 0
    %611 = vmatprep.subr.bf16.mxu0 0
    %612 = vmatpush1.bf16.msra.mxu0 %v485
    %613 = vmatprep.subr.bf16.mxu0 0
    %614 = vmatpush1.bf16.msra.mxu0 %v484
    %615 = vmatprep.subr.bf16.mxu0 0
    %616 = vmatpush1.bf16.msra.mxu0 %v483
    %617 = vmatprep.subr.bf16.mxu0 0
    %618 = vmatpush1.bf16.msra.mxu0 %v482
    %619 = vmatprep.subr.bf16.mxu0 0
    %620 = vmatpush1.bf16.msra.mxu0 %v481
    %621 = vmatprep.subr.bf16.mxu0 0
    %622 = vmatpush1.bf16.msra.mxu0 %v480
    %623 = vmatprep.subr.bf16.mxu0 0
    %624 = vmatpush1.bf16.msra.mxu0 %v479
    %625 = vmatprep.subr.bf16.mxu0 0
    %626 = vmatpush1.bf16.msra.mxu0 %v478
    %627 = vmatprep.subr.bf16.mxu0 0
    %628 = vmatpush2.bf16.msra.mxu0 %v493
    %629 = vmatprep.subr.bf16.mxu0 0
    %630 = vmatpush2.bf16.msra.mxu0 %v492
    %631 = vmatprep.subr.bf16.mxu0 0
    %632 = vmatpush2.bf16.msra.mxu0 %v491
    %633 = vmatprep.subr.bf16.mxu0 0
    %634 = vmatpush2.bf16.msra.mxu0 %v490
    %635 = vmatprep.subr.bf16.mxu0 0
    %636 = vmatpush2.bf16.msra.mxu0 %v489
    %637 = vmatprep.subr.bf16.mxu0 0
    %638 = vmatpush2.bf16.msra.mxu0 %v488
    %639 = vmatprep.subr.bf16.mxu0 0
    %640 = vmatpush2.bf16.msra.mxu0 %v487
    %641 = vmatprep.subr.bf16.mxu0 0
    %642 = vmatpush2.bf16.msra.mxu0 %v486
    %643 = vmatprep.mubr.bf16.mxu0 %v89
    %644 = vmatmul.mubr.bf16.gmra.mxu0 %v88
    %v645 = vpop.f32.mrf.mxu0
    %v646 = vadd.f32 %v226, %v645
    %v647 = vpop.f32.mrf.mxu0
    %v648 = vpop.f32.mrf.mxu0
    %v649 = vpop.f32.mrf.mxu0
    %650 = vdwg.mxu0
    %651 = vmatprep.subr.bf16.mxu0 0
    %652 = vmatpush1.bf16.msra.mxu0 %v501
    %653 = vmatprep.subr.bf16.mxu0 0
    %654 = vmatpush1.bf16.msra.mxu0 %v500
    %655 = vmatprep.subr.bf16.mxu0 0
    %656 = vmatpush1.bf16.msra.mxu0 %v499
    %657 = vmatprep.subr.bf16.mxu0 0
    %658 = vmatpush1.bf16.msra.mxu0 %v498
    %659 = vmatprep.subr.bf16.mxu0 0
    %660 = vmatpush1.bf16.msra.mxu0 %v497
    %661 = vmatprep.subr.bf16.mxu0 0
    %662 = vmatpush1.bf16.msra.mxu0 %v496
    %663 = vmatprep.subr.bf16.mxu0 0
    %664 = vmatpush1.bf16.msra.mxu0 %v495
    %665 = vmatprep.subr.bf16.mxu0 0
    %666 = vmatpush1.bf16.msra.mxu0 %v494
    %667 = vmatprep.subr.bf16.mxu0 0
    %668 = vmatpush2.bf16.msra.mxu0 %v509
    %669 = vmatprep.subr.bf16.mxu0 0
    %670 = vmatpush2.bf16.msra.mxu0 %v508
    %671 = vmatprep.subr.bf16.mxu0 0
    %672 = vmatpush2.bf16.msra.mxu0 %v507
    %673 = vmatprep.subr.bf16.mxu0 0
    %674 = vmatpush2.bf16.msra.mxu0 %v506
    %675 = vmatprep.subr.bf16.mxu0 0
    %676 = vmatpush2.bf16.msra.mxu0 %v505
    %677 = vmatprep.subr.bf16.mxu0 0
    %678 = vmatpush2.bf16.msra.mxu0 %v504
    %679 = vmatprep.subr.bf16.mxu0 0
    %680 = vmatpush2.bf16.msra.mxu0 %v503
    %681 = vmatprep.subr.bf16.mxu0 0
    %682 = vmatpush2.bf16.msra.mxu0 %v502
    %683 = vmatprep.mubr.bf16.mxu0 %v91
    %684 = vmatmul.mubr.bf16.gmra.mxu0 %v90
    %v685 = vpop.f32.mrf.mxu0
    %v686 = vadd.f32 %v646, %v685
    %v687 = vpop.f32.mrf.mxu0
    %v688 = vpop.f32.mrf.mxu0
    %v689 = vpop.f32.mrf.mxu0
    %690 = vdwg.mxu0
    %691 = vmatprep.subr.bf16.mxu0 0
    %692 = vmatpush1.bf16.msra.mxu0 %v517
    %693 = vmatprep.subr.bf16.mxu0 0
    %694 = vmatpush1.bf16.msra.mxu0 %v516
    %695 = vmatprep.subr.bf16.mxu0 0
    %696 = vmatpush1.bf16.msra.mxu0 %v515
    %697 = vmatprep.subr.bf16.mxu0 0
    %698 = vmatpush1.bf16.msra.mxu0 %v514
    %699 = vmatprep.subr.bf16.mxu0 0
    %700 = vmatpush1.bf16.msra.mxu0 %v513
    %701 = vmatprep.subr.bf16.mxu0 0
    %702 = vmatpush1.bf16.msra.mxu0 %v512
    %703 = vmatprep.subr.bf16.mxu0 0
    %704 = vmatpush1.bf16.msra.mxu0 %v511
    %705 = vmatprep.subr.bf16.mxu0 0
    %706 = vmatpush1.bf16.msra.mxu0 %v510
    %707 = vmatprep.subr.bf16.mxu0 0
    %708 = vmatpush2.bf16.msra.mxu0 %v525
    %709 = vmatprep.subr.bf16.mxu0 0
    %710 = vmatpush2.bf16.msra.mxu0 %v524
    %711 = vmatprep.subr.bf16.mxu0 0
    %712 = vmatpush2.bf16.msra.mxu0 %v523
    %713 = vmatprep.subr.bf16.mxu0 0
    %714 = vmatpush2.bf16.msra.mxu0 %v522
    %715 = vmatprep.subr.bf16.mxu0 0
    %716 = vmatpush2.bf16.msra.mxu0 %v521
    %717 = vmatprep.subr.bf16.mxu0 0
    %718 = vmatpush2.bf16.msra.mxu0 %v520
    %719 = vmatprep.subr.bf16.mxu0 0
    %720 = vmatpush2.bf16.msra.mxu0 %v519
    %721 = vmatprep.subr.bf16.mxu0 0
    %722 = vmatpush2.bf16.msra.mxu0 %v518
    %723 = vmatprep.mubr.bf16.mxu0 %v93
    %724 = vmatmul.mubr.bf16.gmra.mxu0 %v92
    %v725 = vpop.f32.mrf.mxu0
    %v726 = vadd.f32 %v686, %v725
    %v727 = vpop.f32.mrf.mxu0
    %v728 = vpop.f32.mrf.mxu0
    %v729 = vpop.f32.mrf.mxu0
    %730 = vdwg.mxu0
    %731 = vmatprep.subr.bf16.mxu0 0
    %732 = vmatpush1.bf16.msra.mxu0 %v533
    %733 = vmatprep.subr.bf16.mxu0 0
    %734 = vmatpush1.bf16.msra.mxu0 %v532
    %735 = vmatprep.subr.bf16.mxu0 0
    %736 = vmatpush1.bf16.msra.mxu0 %v531
    %737 = vmatprep.subr.bf16.mxu0 0
    %738 = vmatpush1.bf16.msra.mxu0 %v530
    %739 = vmatprep.subr.bf16.mxu0 0
    %740 = vmatpush1.bf16.msra.mxu0 %v529
    %741 = vmatprep.subr.bf16.mxu0 0
    %742 = vmatpush1.bf16.msra.mxu0 %v528
    %743 = vmatprep.subr.bf16.mxu0 0
    %744 = vmatpush1.bf16.msra.mxu0 %v527
    %745 = vmatprep.subr.bf16.mxu0 0
    %746 = vmatpush1.bf16.msra.mxu0 %v526
    %747 = vmatprep.subr.bf16.mxu0 0
    %748 = vmatpush2.bf16.msra.mxu0 0
    %749 = vmatprep.subr.bf16.mxu0 0
    %750 = vmatpush2.bf16.msra.mxu0 %v609
    %751 = vmatprep.subr.bf16.mxu0 0
    %752 = vmatpush2.bf16.msra.mxu0 %v539
    %753 = vmatprep.subr.bf16.mxu0 0
    %754 = vmatpush2.bf16.msra.mxu0 %v538
    %755 = vmatprep.subr.bf16.mxu0 0
    %756 = vmatpush2.bf16.msra.mxu0 %v537
    %757 = vmatprep.subr.bf16.mxu0 0
    %758 = vmatpush2.bf16.msra.mxu0 %v536
    %759 = vmatprep.subr.bf16.mxu0 0
    %760 = vmatpush2.bf16.msra.mxu0 %v535
    %761 = vmatprep.subr.bf16.mxu0 0
    %762 = vmatpush2.bf16.msra.mxu0 %v534
    %763 = vmatprep.mubr.bf16.mxu0 %v605
    %764 = vmatmul.mubr.bf16.gmra.mxu0 %v94
    %v765 = vpop.f32.mrf.mxu0
    %v766 = vadd.f32 %v726, %v765
    %v767 = vpop.f32.mrf.mxu0
    %v768 = vpop.f32.mrf.mxu0
    %v769 = vpop.f32.mrf.mxu0
    %770 = vdwg.mxu0
    %v771 = vmax.f32 %v766, 0.0
    %v772 = vpack.c.bf16 %v771, %v771
    %v773 = vld [vmem:[#allocation6] sm:$0xf]
    %v774 = vld [vmem:[#allocation6 + $0x4] sm:$0xf]
    %v775 = vld [vmem:[#allocation6 + $0x8] sm:$0xf]
    %v776 = vld [vmem:[#allocation6 + $0xc] sm:$0xf]
    %v777 = vld [vmem:[#allocation6 + $0x10] sm:$0xf]
    %v778 = vld [vmem:[#allocation6 + $0x14] sm:$0xf]
    %v779 = vld [vmem:[#allocation6 + $0x18] sm:$0xf]
    %v780 = vld [vmem:[#allocation6 + $0x1c] sm:$0xf]
    %v781 = vld [vmem:[#allocation6 + $0x20] sm:$0xf]
    %v782 = vld [vmem:[#allocation6 + $0x24] sm:$0xf]
    %v783 = vld [vmem:[#allocation6 + $0x28] sm:$0xf]
    %v784 = vld [vmem:[#allocation6 + $0x2c] sm:$0xf]
    %v785 = vld [vmem:[#allocation6 + $0x30] sm:$0xf]
    %v786 = vld [vmem:[#allocation6 + $0x34] sm:$0xf]
    %v787 = vld [vmem:[#allocation6 + $0x38] sm:$0xf]
    %v788 = vld [vmem:[#allocation6 + $0x3c] sm:$0xf]
    %v789 = vld [vmem:[%s4] sm:$0x1]
    %v791 = vlaneseq
    %v792 = vshrl.u32 %v791, 7
    %v793 = vsub.s32 0, %v792
    %v794 = vrot.slane %v789, %v793
    %v812 = vunpack.c.l.b16 %v773
    %v813 = vunpack.c.l.b16 %v774
    %v814 = vunpack.c.l.b16 %v775
    %v815 = vunpack.c.l.b16 %v776
    %v816 = vunpack.c.l.b16 %v777
    %v817 = vunpack.c.l.b16 %v778
    %v818 = vunpack.c.l.b16 %v779
    %v819 = vunpack.c.l.b16 %v780
    %v820 = vunpack.c.l.b16 %v781
    %v821 = vunpack.c.l.b16 %v782
    %v822 = vunpack.c.l.b16 %v783
    %v823 = vunpack.c.l.b16 %v784
    %v824 = vunpack.c.l.b16 %v785
    %v825 = vunpack.c.l.b16 %v786
    %v826 = vunpack.c.l.b16 %v787
    %v827 = vunpack.c.l.b16 %v788
    %v828 = vpack.c.b16 %v813, %v812
    %v829 = vpack.c.b16 %v815, %v814
    %v830 = vpack.c.b16 %v817, %v816
    %v831 = vpack.c.b16 %v819, %v818
    %v832 = vpack.c.b16 %v821, %v820
    %v833 = vpack.c.b16 %v823, %v822
    %v834 = vpack.c.b16 %v825, %v824
    %v835 = vpack.c.b16 %v827, %v826
    %844 = vmatprep.subr.bf16.mxu0 0
    %845 = vmatpush1.bf16.msra.mxu0 %v835
    %846 = vmatprep.subr.bf16.mxu0 0
    %847 = vmatpush1.bf16.msra.mxu0 %v834
    %848 = vmatprep.subr.bf16.mxu0 0
    %849 = vmatpush1.bf16.msra.mxu0 %v833
    %850 = vmatprep.subr.bf16.mxu0 0
    %851 = vmatpush1.bf16.msra.mxu0 %v832
    %852 = vmatprep.subr.bf16.mxu0 0
    %853 = vmatpush1.bf16.msra.mxu0 %v831
    %854 = vmatprep.subr.bf16.mxu0 0
    %855 = vmatpush1.bf16.msra.mxu0 %v830
    %856 = vmatprep.subr.bf16.mxu0 0
    %857 = vmatpush1.bf16.msra.mxu0 %v829
    %858 = vmatprep.subr.bf16.mxu0 0
    %859 = vmatpush1.bf16.msra.mxu0 %v828
    %860 = vmatprep.subr.bf16.mxu0 0
    %861 = vmatpush2.bf16.msra.mxu0 0
    %862 = vmatprep.subr.bf16.mxu0 0
    %863 = vmatpush2.bf16.msra.mxu0 0
    %864 = vmatprep.subr.bf16.mxu0 0
    %865 = vmatpush2.bf16.msra.mxu0 0
    %866 = vmatprep.subr.bf16.mxu0 0
    %867 = vmatpush2.bf16.msra.mxu0 0
    %868 = vmatprep.subr.bf16.mxu0 0
    %869 = vmatpush2.bf16.msra.mxu0 0
    %870 = vmatprep.subr.bf16.mxu0 0
    %871 = vmatpush2.bf16.msra.mxu0 0
    %872 = vmatprep.subr.bf16.mxu0 0
    %873 = vmatpush2.bf16.msra.mxu0 0
    %874 = vmatprep.subr.bf16.mxu0 0
    %875 = vmatpush2.bf16.msra.mxu0 0
    %876 = vmatprep.mubr.bf16.mxu0 0
    %877 = vmatmul.mubr.bf16.gmra.mxu0 %v772
    %v878 = vpop.f32.mrf.mxu0
    %v879 = vadd.f32 %v794, %v878
    %v880 = vpop.f32.mrf.mxu0
    %v881 = vpop.f32.mrf.mxu0
    %v882 = vpop.f32.mrf.mxu0
    %883 = vdwg.mxu0
    %v884 = vmax.f32 %v879, 0.0
    %v885 = vpack.c.bf16 %v884, %v884
    %v886 = vld [vmem:[#allocation7] sm:$0xf]
    %v887 = vld [vmem:[#allocation7 + $0x4] sm:$0xf]
    %v888 = vld [vmem:[#allocation7 + $0x8] sm:$0xf]
    %v889 = vld [vmem:[#allocation7 + $0xc] sm:$0xf]
    %v890 = vld [vmem:[#allocation7 + $0x10] sm:$0xf]
    %v891 = vld [vmem:[#allocation7 + $0x14] sm:$0xf]
    %v892 = vld [vmem:[#allocation7 + $0x18] sm:$0xf]
    %v893 = vld [vmem:[#allocation7 + $0x1c] sm:$0xf]
    %v894 = vld [vmem:[#allocation7 + $0x20] sm:$0xf]
    %v895 = vld [vmem:[#allocation7 + $0x24] sm:$0xf]
    %v896 = vld [vmem:[#allocation7 + $0x28] sm:$0xf]
    %v897 = vld [vmem:[#allocation7 + $0x2c] sm:$0xf]
    %v898 = vld [vmem:[#allocation7 + $0x30] sm:$0xf]
    %v899 = vld [vmem:[#allocation7 + $0x34] sm:$0xf]
    %v900 = vld [vmem:[#allocation7 + $0x38] sm:$0xf]
    %v901 = vld [vmem:[#allocation7 + $0x3c] sm:$0xf]
    %v902 = vld [vmem:[%s6] sm:$0x1]
    %v904 = vlaneseq
    %v905 = vshrl.u32 %v904, 7
    %v906 = vsub.s32 0, %v905
    %v907 = vrot.slane %v902, %v906
    %v925 = vunpack.c.l.b16 %v886
    %v926 = vunpack.c.l.b16 %v887
    %v927 = vunpack.c.l.b16 %v888
    %v928 = vunpack.c.l.b16 %v889
    %v929 = vunpack.c.l.b16 %v890
    %v930 = vunpack.c.l.b16 %v891
    %v931 = vunpack.c.l.b16 %v892
    %v932 = vunpack.c.l.b16 %v893
    %v933 = vunpack.c.l.b16 %v894
    %v934 = vunpack.c.l.b16 %v895
    %v935 = vunpack.c.l.b16 %v896
    %v936 = vunpack.c.l.b16 %v897
    %v937 = vunpack.c.l.b16 %v898
    %v938 = vunpack.c.l.b16 %v899
    %v939 = vunpack.c.l.b16 %v900
    %v940 = vunpack.c.l.b16 %v901
    %v941 = vpack.c.b16 %v926, %v925
    %v942 = vpack.c.b16 %v928, %v927
    %v943 = vpack.c.b16 %v930, %v929
    %v944 = vpack.c.b16 %v932, %v931
    %v945 = vpack.c.b16 %v934, %v933
    %v946 = vpack.c.b16 %v936, %v935
    %v947 = vpack.c.b16 %v938, %v937
    %v948 = vpack.c.b16 %v940, %v939
    %957 = vmatprep.subr.bf16.mxu0 0
    %958 = vmatpush1.bf16.msra.mxu0 %v948
    %959 = vmatprep.subr.bf16.mxu0 0
    %960 = vmatpush1.bf16.msra.mxu0 %v947
    %961 = vmatprep.subr.bf16.mxu0 0
    %962 = vmatpush1.bf16.msra.mxu0 %v946
    %963 = vmatprep.subr.bf16.mxu0 0
    %964 = vmatpush1.bf16.msra.mxu0 %v945
    %965 = vmatprep.subr.bf16.mxu0 0
    %966 = vmatpush1.bf16.msra.mxu0 %v944
    %967 = vmatprep.subr.bf16.mxu0 0
    %968 = vmatpush1.bf16.msra.mxu0 %v943
    %969 = vmatprep.subr.bf16.mxu0 0
    %970 = vmatpush1.bf16.msra.mxu0 %v942
    %971 = vmatprep.subr.bf16.mxu0 0
    %972 = vmatpush1.bf16.msra.mxu0 %v941
    %973 = vmatprep.subr.bf16.mxu0 0
    %974 = vmatpush2.bf16.msra.mxu0 0
    %975 = vmatprep.subr.bf16.mxu0 0
    %976 = vmatpush2.bf16.msra.mxu0 0
    %977 = vmatprep.subr.bf16.mxu0 0
    %978 = vmatpush2.bf16.msra.mxu0 0
    %979 = vmatprep.subr.bf16.mxu0 0
    %980 = vmatpush2.bf16.msra.mxu0 0
    %981 = vmatprep.subr.bf16.mxu0 0
    %982 = vmatpush2.bf16.msra.mxu0 0
    %983 = vmatprep.subr.bf16.mxu0 0
    %984 = vmatpush2.bf16.msra.mxu0 0
    %985 = vmatprep.subr.bf16.mxu0 0
    %986 = vmatpush2.bf16.msra.mxu0 0
    %987 = vmatprep.subr.bf16.mxu0 0
    %988 = vmatpush2.bf16.msra.mxu0 0
    %989 = vmatprep.mubr.bf16.mxu0 0
    %990 = vmatmul.mubr.bf16.gmra.mxu0 %v885
    %v991 = vpop.f32.mrf.mxu0
    %v992 = vadd.f32 %v907, %v991
    %v993 = vpop.f32.mrf.mxu0
    %v994 = vpop.f32.mrf.mxu0
    %v995 = vpop.f32.mrf.mxu0
    %996 = vdwg.mxu0
    %v997 = vpack.c.bf16 %v992, %v992
    %998 = vst [vmem:[%s7] sm:$0xf] %v997
    // Predicated region
    $region46: #{_forward.1} parent=1 // pred_check
      _
    $region47: #{_forward.1} parent=1 // pred_check_branch
      %1000 = sbr.rel (0) target = $region49
    $region48: #{_forward.1} parent=1 // pred_region
      _
    $region49: #{_forward.1} parent=1 // pred_fallthru
      _
    // Predicated region
    $region50: #{_forward.1} parent=1 // pred_check
      _
    $region51: #{_forward.1} parent=1 // pred_check_branch
      %1002 = sbr.rel (0) target = $region53
    $region52: #{_forward.1} parent=1 // pred_region
      _
    $region53: #{_forward.1} parent=1 // pred_fallthru
      _
    %1003 = vsyncpa [#allocation3], 1
    %1004 = vsyncpa [#allocation5], 1
    %1005 = vsyncpa [#allocation8], 1

</llo_original>
